<compile_context>
chip_gen: v7x
topology: tpu7x:2x2x1
jax: 0.10.0
libtpu: 0.0.40
codegen_flags: <defaults>
</compile_context>

<pallas_src>
import jax
import jax.numpy as jnp
from jax.experimental import pallas as pl
from jax.experimental.pallas import tpu as pltpu

EPS = 1e-21

# ~2 MiB per VMEM buffer; with double buffering of input+output that is
# ~8 MiB of VMEM, comfortably under the default scoped limits on v5e/v6e/v7x.
_PER_BUFFER_BYTES = 2 * 1024 * 1024


def _tile_rows(row_bytes, total_rows):
    """Pick a row-tile size: big enough to amortize per-step overhead, small
    enough to double-buffer in VMEM, and giving >= ~8 grid steps on large
    inputs so the pipeline (and both v7x TensorCores) stays busy."""
    tr = _PER_BUFFER_BYTES // row_bytes
    tr = min(tr, max(512, -(-total_rows // 8)))
    tr = max(8, tr - (tr % 16))
    if tr >= total_rows:
        return int(total_rows)  # single full-extent block (always layout-legal)
    return int(tr)


def _scale_from_sqsum(sqsum):
    """(1 - 1/(exp(|x|)+eps)) / (|x|+eps), with the divides on the EUP."""
    x_norm = jnp.sqrt(sqsum)
    inv_exp = pl.reciprocal(jnp.exp(x_norm) + EPS, approx=True)
    inv_norm = pl.reciprocal(x_norm + EPS, approx=True)
    return (1.0 - inv_exp) * inv_norm


def _squash_packed_kernel(seg_ref, x_ref, o_ref):
    # x_ref: (TR, 128) with 128//d capsules packed per lane-dense row.
    # seg_ref: (128, 128) block-diagonal ones; (x*x) @ seg gives each lane the
    # sum of squares of its own capsule (segmented reduce + broadcast on MXU).
    x = x_ref[...].astype(jnp.float32)
    sqsum = jnp.dot(x * x, seg_ref[...], preferred_element_type=jnp.float32)
    o_ref[...] = (_scale_from_sqsum(sqsum) * x).astype(o_ref.dtype)


def _squash_rows_kernel(x_ref, o_ref):
    # Generic fallback: one capsule per row, reduce over the lane axis.
    x = x_ref[...].astype(jnp.float32)
    sqsum = jnp.sum(x * x, axis=-1, keepdims=True)
    o_ref[...] = (_scale_from_sqsum(sqsum) * x).astype(o_ref.dtype)


def squash(x):
    """x: (b, n, d) -> squash(x): (b, n, d), matching the PyTorch module."""
    b, n, d = x.shape
    rows = b * n
    if rows == 0 or d == 0:
        return x
    itemsize = x.dtype.itemsize

    if 128 % d == 0 and (rows * d) % 128 == 0:
        # Lane-dense packed path: 128 // d capsules per 128-wide row.
        r = (rows * d) // 128
        x2 = x.reshape(r, 128)  # contiguous row-major reshape -> no copy
        tr = _tile_rows(128 * itemsize, r)
        gi = jax.lax.broadcasted_iota(jnp.int32, (128, 128), 0) // d
        gj = jax.lax.broadcasted_iota(jnp.int32, (128, 128), 1) // d
        seg = (gi == gj).astype(jnp.float32)
        out2 = pl.pallas_call(
            _squash_packed_kernel,
            out_shape=jax.ShapeDtypeStruct((r, 128), x.dtype),
            grid_spec=pltpu.PrefetchScalarGridSpec(
                num_scalar_prefetch=0,
                grid=(pl.cdiv(r, tr),),
                in_specs=[pl.BlockSpec((128, 128), lambda i: (0, 0)),
                          pl.BlockSpec((tr, 128), lambda i: (i, 0))],
                out_specs=pl.BlockSpec((tr, 128), lambda i: (i, 0)),
            ),
            compiler_params=pltpu.CompilerParams(
                dimension_semantics=("parallel",)),
        )(seg, x2)
        return out2.reshape(b, n, d)

    # Generic fallback (capsule dim does not pack evenly into 128 lanes).
    x2 = x.reshape(rows, d)
    d_padded = -(-d // 128) * 128  # account for lane padding in VMEM sizing
    tr = _tile_rows(d_padded * itemsize, rows)
    out2 = pl.pallas_call(
        _squash_rows_kernel,
        out_shape=jax.ShapeDtypeStruct((rows, d), x.dtype),
        grid_spec=pltpu.PrefetchScalarGridSpec(
            num_scalar_prefetch=0,
            grid=(pl.cdiv(rows, tr),),
            in_specs=[pl.BlockSpec((tr, d), lambda i: (i, 0))],
            out_specs=pl.BlockSpec((tr, d), lambda i: (i, 0)),
        ),
        compiler_params=pltpu.CompilerParams(
            dimension_semantics=("parallel",)),
    )(x2)
    return out2.reshape(b, n, d)


def squash_ref(x):
    """Pure-JAX reference matching the PyTorch semantics exactly."""
    x = x.astype(jnp.float32)
    x_norm = jnp.sqrt(jnp.sum(x * x, axis=2, keepdims=True))
    return (1.0 - 1.0 / (jnp.exp(x_norm) + EPS)) * (x / (x_norm + EPS))


def _check(x, atol=5e-3, rtol=5e-3):
    out = jax.block_until_ready(squash(x))
    ref = squash_ref(x)
    assert out.shape == x.shape
    assert bool(jnp.all(jnp.isfinite(out))), "non-finite output"
    # EUP approx-reciprocal path -> compare at ~1e-3-level tolerance.
    assert jnp.allclose(out.astype(jnp.float32), ref, atol=atol, rtol=rtol), \
        "mismatch vs reference"


if __name__ == "__main__":
    key = jax.random.PRNGKey(0)
    k0, k1, k2 = jax.random.split(key, 3)

    # Primary small shape matching the module's (b, n, d) contract.
    _check(jax.random.normal(k0, (2, 8, 32), dtype=jnp.float32))

    # Fallback path (capsule dim that does not pack evenly into 128 lanes).
    _check(jax.random.normal(k1, (2, 8, 48), dtype=jnp.float32))

    # Multi-step grid with a partial trailing block (exercises the pipeline).
    _check(jax.random.normal(k2, (2, 9600, 32), dtype=jnp.float32))

    print("KERNEL_OK")
</pallas_src>

<mosaic_0001>
module attributes {stable_mosaic.version = 11 : i64} {
  func.func @_squash_packed_kernel(%arg0: i32, %arg1: memref<128x128xf32, #tpu.memory_space<vmem>>, %arg2: memref<4x128xf32, #tpu.memory_space<vmem>>, %arg3: memref<4x128xf32, #tpu.memory_space<vmem>>) attributes {dimension_semantics = [#tpu.dimension_semantics<parallel>], iteration_bounds = array<i64: 1>, scalar_prefetch = 0 : i64, scratch_operands = 0 : i64, tpu.core_type = #tpu.core_type<tc>, window_params = [{pipeline_mode = #tpu.pipeline_mode<synchronous>, transform_indices = @transform_0, window_bounds = array<i64: 128, 128>}, {transform_indices = @transform_1, window_bounds = array<i64: 4, 128>}, {transform_indices = @transform_2, window_bounds = array<i64: 4, 128>}]} {
    %c0 = arith.constant 0 : index
    %c0_0 = arith.constant 0 : index
    %0 = vector.load %arg2[%c0, %c0_0] : memref<4x128xf32, #tpu.memory_space<vmem>>, vector<4x128xf32>
    %1 = arith.mulf %0, %0 : vector<4x128xf32>
    %c0_1 = arith.constant 0 : index
    %c0_2 = arith.constant 0 : index
    %2 = vector.load %arg1[%c0_1, %c0_2] : memref<128x128xf32, #tpu.memory_space<vmem>>, vector<128x128xf32>
    %cst = arith.constant dense<0.000000e+00> : vector<4x128xf32>
    %3 = tpu.matmul %1, %2, %cst {dimension_numbers = #tpu.dot_dimension_numbers<[1], [0], [0], [1], [0, 0, 1, 1], [], []>} : vector<4x128xf32>, vector<128x128xf32>, vector<4x128xf32> -> vector<4x128xf32>
    %4 = math.sqrt %3 : vector<4x128xf32>
    %5 = math.exp %4 : vector<4x128xf32>
    %cst_3 = arith.constant 9.99999968E-22 : f32
    %6 = vector.broadcast %cst_3 : f32 to vector<4x128xf32>
    %7 = arith.addf %5, %6 : vector<4x128xf32>
    %8 = tpu.reciprocal %7 {approx = true} : vector<4x128xf32> -> vector<4x128xf32>
    %cst_4 = arith.constant 9.99999968E-22 : f32
    %9 = vector.broadcast %cst_4 : f32 to vector<4x128xf32>
    %10 = arith.addf %4, %9 : vector<4x128xf32>
    %11 = tpu.reciprocal %10 {approx = true} : vector<4x128xf32> -> vector<4x128xf32>
    %cst_5 = arith.constant 1.000000e+00 : f32
    %12 = vector.broadcast %cst_5 : f32 to vector<4x128xf32>
    %13 = arith.subf %12, %8 : vector<4x128xf32>
    %14 = arith.mulf %13, %11 : vector<4x128xf32>
    %15 = arith.mulf %14, %0 : vector<4x128xf32>
    %c0_6 = arith.constant 0 : index
    %c0_7 = arith.constant 0 : index
    %16 = vector.load %arg3[%c0_6, %c0_7] : memref<4x128xf32, #tpu.memory_space<vmem>>, vector<4x128xf32>
    tpu.vector_store %arg3[%c0_6, %c0_7], %15 {strides = array<i32>} : memref<4x128xf32, #tpu.memory_space<vmem>>, vector<4x128xf32>,
    return
  }
  func.func @transform_0(%arg0: i32) -> (i32, i32) {
    %c0_i32 = arith.constant 0 : i32
    %c0_i32_0 = arith.constant 0 : i32
    %c0_i32_1 = arith.constant 0 : i32
    return %c0_i32, %c0_i32_0 : i32, i32
  }
  func.func @transform_1(%arg0: i32) -> (i32, i32) {
    %c0_i32 = arith.constant 0 : i32
    %c0_i32_0 = arith.constant 0 : i32
    return %arg0, %c0_i32 : i32, i32
  }
  func.func @transform_2(%arg0: i32) -> (i32, i32) {
    %c0_i32 = arith.constant 0 : i32
    %c0_i32_0 = arith.constant 0 : i32
    return %arg0, %c0_i32 : i32, i32
  }
}

</mosaic_0001>

<llo_original>
// kernel: tpu_custom_call.1
$region0: #{tpu_custom_call.1}
  #allocation0 [shape = 'u32[]', space=smem, size = 0x4, offset = 0x4, fixed_abs, tag = 'smem constant byte address 0x4 - core index']
  #allocation1 [shape = 'u32[144,128]{1,0:T(1,128)}', space=vmem, size = 0x12000, scoped, tag = 'internal scratch']
  %s0 = inlined_call_operand.hbm [shape: f32[128,128], index: 0, kind: input, shape index: {}]
  %s1 = inlined_call_operand.hbm [shape: f32[4,128], index: 1, kind: input, shape index: {}]
  %s2 = inlined_call_operand.hbm [shape: f32[4,128], index: 2, kind: output, shape index: {}]
  %s3 = sld [smem:[#allocation0]]
  $region26: #{tpu_custom_call.1} parent=0
    _
  %s5 = ssub.s32 1, %s3
  %s6 = scalar_select 0, %s5, %s3
  $region1: #{tpu_custom_call.1} parent=0
    #allocation2 [shape = 'u8[65536]{0}', space=vmem, size = 0x10000, scoped, tag = 'input window, operand 0, single buffered']
    #allocation3 [shape = 's32[1]{0}', space=sflag, size = 0x4, scoped, tag = 'scoped memory for tpu_custom_call.1']
    #allocation4 [shape = 's32[1]{0}', space=sflag, size = 0x4, scoped, tag = 'scoped memory for tpu_custom_call.1']
    #allocation5 [shape = 'u8[2048]{0}', space=vmem, size = 0x800, scoped, tag = 'input window, operand 1, single buffered']
    #allocation6 [shape = 's32[1]{0}', space=sflag, size = 0x4, scoped, tag = 'scoped memory for tpu_custom_call.1']
    #allocation7 [shape = 'u8[2048]{0}', space=vmem, size = 0x800, scoped, tag = 'output window, operand 0, single buffered']
    %7 = vsyncpa [#allocation3], 0
    %8 = vsyncpa [#allocation6], 0
    %9 = vsyncpa [#allocation4], 0
    // Predicated region
    $region2: #{tpu_custom_call.1} parent=1 // pred_check
      _
    $region3: #{tpu_custom_call.1} parent=1 // pred_check_branch
      %11 = sbr.rel (0) target = $region5
    $region4: #{tpu_custom_call.1} parent=1 // pred_region
      %s13 = ssub.s32 2048, 2048
      %14 = vsyncadd [#allocation3], %s13
      %s15 = sshll.u32 [#allocation2], 4
      %s16 = int_to_ptr.vmem [resolvable:$true] %s15
      %21 = dma.hbm_to_vmem [thread:$0]  %s0, 2048, %s16, [#allocation3], 128, 128, 8
    $region5: #{tpu_custom_call.1} parent=1 // pred_fallthru
      _
    // Predicated region
    $region6: #{tpu_custom_call.1} parent=1 // pred_check
      _
    $region7: #{tpu_custom_call.1} parent=1 // pred_check_branch
      %23 = sbr.rel (0) target = $region9
    $region8: #{tpu_custom_call.1} parent=1 // pred_region
      %s25 = ssub.s32 64, 64
      %26 = vsyncadd [#allocation6], %s25
      %s28 = sshll.u32 [#allocation5], 4
      %s29 = int_to_ptr.vmem [resolvable:$true] %s28
      %31 = dma.hbm_to_vmem [thread:$0]  %s1, 64, %s29, [#allocation6]
    $region9: #{tpu_custom_call.1} parent=1 // pred_fallthru
      _
    // Predicated region
    $region10: #{tpu_custom_call.1} parent=1 // pred_check
      _
    $region11: #{tpu_custom_call.1} parent=1 // pred_check_branch
      %33 = sbr.rel (0) target = $region13
    $region12: #{tpu_custom_call.1} parent=1 // pred_region
      %34 = dma.done [#allocation3], 2048
    $region13: #{tpu_custom_call.1} parent=1 // pred_fallthru
      _
    // Predicated region
    $region14: #{tpu_custom_call.1} parent=1 // pred_check
      _
    $region15: #{tpu_custom_call.1} parent=1 // pred_check_branch
      %36 = sbr.rel (0) target = $region17
    $region16: #{tpu_custom_call.1} parent=1 // pred_region
      %37 = dma.done [#allocation6], 64
    $region17: #{tpu_custom_call.1} parent=1 // pred_fallthru
      _
    %v38 = vld [vmem:[#allocation5] sm:$0xf]
    %v39 = vmul.f32 %v38, %v38
    %v40 = vld [vmem:[#allocation2] sm:$0xff]
    %v41 = vld [vmem:[#allocation2 + $0x8] sm:$0xff]
    %v42 = vld [vmem:[#allocation2 + $0x10] sm:$0xff]
    %v43 = vld [vmem:[#allocation2 + $0x18] sm:$0xff]
    %v44 = vld [vmem:[#allocation2 + $0x20] sm:$0xff]
    %v45 = vld [vmem:[#allocation2 + $0x28] sm:$0xff]
    %v46 = vld [vmem:[#allocation2 + $0x30] sm:$0xff]
    %v47 = vld [vmem:[#allocation2 + $0x38] sm:$0xff]
    %v48 = vld [vmem:[#allocation2 + $0x40] sm:$0xff]
    %v49 = vld [vmem:[#allocation2 + $0x48] sm:$0xff]
    %v50 = vld [vmem:[#allocation2 + $0x50] sm:$0xff]
    %v51 = vld [vmem:[#allocation2 + $0x58] sm:$0xff]
    %v52 = vld [vmem:[#allocation2 + $0x60] sm:$0xff]
    %v53 = vld [vmem:[#allocation2 + $0x68] sm:$0xff]
    %v54 = vld [vmem:[#allocation2 + $0x70] sm:$0xff]
    %v55 = vld [vmem:[#allocation2 + $0x78] sm:$0xff]
    %56 = vmatprep.subr.mxu0 0.0
    %57 = vmatpush1.msra.mxu0 %v40
    %58 = vmatprep.subr.mxu0 0.0
    %59 = vmatpush1.msra.mxu0 %v41
    %60 = vmatprep.subr.mxu0 0.0
    %61 = vmatpush1.msra.mxu0 %v42
    %62 = vmatprep.subr.mxu0 0.0
    %63 = vmatpush1.msra.mxu0 %v43
    %64 = vmatprep.subr.mxu0 0.0
    %65 = vmatpush1.msra.mxu0 %v44
    %66 = vmatprep.subr.mxu0 0.0
    %67 = vmatpush1.msra.mxu0 %v45
    %68 = vmatprep.subr.mxu0 0.0
    %69 = vmatpush1.msra.mxu0 %v46
    %70 = vmatprep.subr.mxu0 0.0
    %71 = vmatpush1.msra.mxu0 %v47
    %72 = vmatprep.subr.mxu0 0.0
    %73 = vmatpush1.msra.mxu0 %v48
    %74 = vmatprep.subr.mxu0 0.0
    %75 = vmatpush1.msra.mxu0 %v49
    %76 = vmatprep.subr.mxu0 0.0
    %77 = vmatpush1.msra.mxu0 %v50
    %78 = vmatprep.subr.mxu0 0.0
    %79 = vmatpush1.msra.mxu0 %v51
    %80 = vmatprep.subr.mxu0 0.0
    %81 = vmatpush1.msra.mxu0 %v52
    %82 = vmatprep.subr.mxu0 0.0
    %83 = vmatpush1.msra.mxu0 %v53
    %84 = vmatprep.subr.mxu0 0.0
    %85 = vmatpush1.msra.mxu0 %v54
    %86 = vmatprep.subr.mxu0 0.0
    %87 = vmatpush1.msra.mxu0 %v55
    %88 = vmatprep.subr.mxu0 0.0
    %89 = vmatpush1.msra.mxu0 0.0
    %90 = vmatprep.subr.mxu0 0.0
    %91 = vmatpush1.msra.mxu0 0.0
    %92 = vmatprep.subr.mxu0 0.0
    %93 = vmatpush1.msra.mxu0 0.0
    %94 = vmatprep.subr.mxu0 0.0
    %95 = vmatpush1.msra.mxu0 0.0
    %96 = vmatprep.subr.mxu0 0.0
    %97 = vmatpush1.msra.mxu0 0.0
    %98 = vmatprep.subr.mxu0 0.0
    %99 = vmatpush1.msra.mxu0 0.0
    %100 = vmatprep.subr.mxu0 0.0
    %101 = vmatpush1.msra.mxu0 0.0
    %102 = vmatprep.subr.mxu0 0.0
    %103 = vmatpush1.msra.mxu0 0.0
    %104 = vmatprep.subr.mxu0 0.0
    %105 = vmatpush1.msra.mxu0 0.0
    %106 = vmatprep.subr.mxu0 0.0
    %107 = vmatpush1.msra.mxu0 0.0
    %108 = vmatprep.subr.mxu0 0.0
    %109 = vmatpush1.msra.mxu0 0.0
    %110 = vmatprep.subr.mxu0 0.0
    %111 = vmatpush1.msra.mxu0 0.0
    %112 = vmatprep.subr.mxu0 0.0
    %113 = vmatpush1.msra.mxu0 0.0
    %114 = vmatprep.subr.mxu0 0.0
    %115 = vmatpush1.msra.mxu0 0.0
    %116 = vmatprep.subr.mxu0 0.0
    %117 = vmatpush1.msra.mxu0 0.0
    %118 = vmatprep.subr.mxu0 0.0
    %119 = vmatpush1.msra.mxu0 0.0
    %120 = vmatprep.mubr.f32.mxu0 0.0
    %121 = vmatmul.mubr.f32.gmra.mrb[0].mxu0 %v39
    %v122 = vpop.f32.mrb[0].mxu0
    %v123 = vadd.f32 0.0, %v122
    %v124 = vpop.f32.mrb[0].mxu0
    %125 = vdwg.mxu0
    %v126 = vrsqrt.pop %v123
    %v127 = vmul.f32 %v123, %v126
    %vm128 = vcmp.eq.f32.partialorder %v123, inf
    %v129 = vsel %vm128, %v123, %v127
    %vm130 = vcmp.eq.f32.partialorder %v123, 0.0
    %v131 = vand.u32 %v123, 2147483648
    %v132 = vsel %vm130, %v131, %v129
    %v133 = vmul.f32 %v132, 1.442695
    %v134 = vpow.pop %v133
    %v135 = vadd.f32 %v134, 1e-21
    %v136 = vrcp.pop %v135
    %v137 = vadd.f32 %v132, 1e-21
    %v138 = vrcp.pop %v137
    %v139 = vsub.f32 1.0, %v136
    %v140 = vmul.f32 %v139, %v138
    %v141 = vmul.f32 %v140, %v38
    %142 = vst [vmem:[#allocation7] sm:$0xf] %v141
    // Predicated region
    $region18: #{tpu_custom_call.1} parent=1 // pred_check
      _
    $region19: #{tpu_custom_call.1} parent=1 // pred_check_branch
      %144 = sbr.rel (0) target = $region21
    $region20: #{tpu_custom_call.1} parent=1 // pred_region
      %s146 = ssub.s32 64, 64
      %147 = vsyncadd [#allocation4], %s146
      %s149 = sshll.u32 [#allocation7], 4
      %s150 = int_to_ptr.vmem [resolvable:$true] %s149
      %152 = dma.vmem_to_hbm [thread:$0]  %s150, 64, %s2, [#allocation4]
    $region21: #{tpu_custom_call.1} parent=1 // pred_fallthru
      _
    // Predicated region
    $region22: #{tpu_custom_call.1} parent=1 // pred_check
      _
    $region23: #{tpu_custom_call.1} parent=1 // pred_check_branch
      %154 = sbr.rel (0) target = $region25
    $region24: #{tpu_custom_call.1} parent=1 // pred_region
      %155 = dma.done [#allocation4], 64
    $region25: #{tpu_custom_call.1} parent=1 // pred_fallthru
      _
    %156 = vsyncpa [#allocation3], 1
    %157 = vsyncpa [#allocation6], 1
    %158 = vsyncpa [#allocation4], 1

</llo_original>
